<compile_context>
chip_gen: v7x
topology: tpu7x:2x2x1
jax: 0.10.0
libtpu: 0.0.40
codegen_flags: <defaults>
</compile_context>

<pallas_src>
import jax
import jax.numpy as jnp
from jax.experimental import pallas as pl
from jax.experimental.pallas import tpu as pltpu


NUM_LOSSES = 2

# Deterministic parameter init (matches torch.ones(num)); unused in forward,
# exactly like the reference module's forward.
awl_params = jnp.ones((NUM_LOSSES,), dtype=jnp.float32)


def _make_sum_kernel(n):
    """Build a kernel that sums `n` scalars held in an SMEM ref (n is static)."""

    def kernel(x_ref, o_ref):
        # x_ref: (n,) f32 in SMEM; o_ref: (1,) f32 in SMEM.
        acc = x_ref[0]
        for i in range(1, n):  # static unroll; a few scalar-ALU adds
            acc = acc + x_ref[i]
        o_ref[0] = acc

    return kernel


def automatic_weighted_loss(*losses):
    """Sum an arbitrary number of scalar losses on-TPU via Pallas (SMEM path)."""
    n = len(losses)
    if n == 0:
        return jnp.float32(0.0)

    vals = jnp.stack([jnp.asarray(l, dtype=jnp.float32).reshape(()) for l in losses])

    out = pl.pallas_call(
        _make_sum_kernel(n),
        out_shape=jax.ShapeDtypeStruct((1,), jnp.float32),
        in_specs=[pl.BlockSpec(memory_space=pltpu.MemorySpace.SMEM)],
        out_specs=pl.BlockSpec(memory_space=pltpu.MemorySpace.SMEM),
    )(vals)
    return out[0]


if __name__ == "__main__":
    key = jax.random.PRNGKey(0)
    k1, k2 = jax.random.split(key)
    # Two synthetic scalar losses (e.g. outputs of two task losses).
    loss_a = jnp.abs(jax.random.normal(k1, ())) + 0.5
    loss_b = jnp.abs(jax.random.normal(k2, ())) + 0.25

    result = automatic_weighted_loss(loss_a, loss_b)
    result = jax.block_until_ready(result)

    expected = loss_a + loss_b
    assert jnp.allclose(result, expected, rtol=1e-6, atol=1e-6), (result, expected)
    print("KERNEL_OK")
</pallas_src>

<mosaic_0001>
module attributes {stable_mosaic.version = 11 : i64} {
  func.func @kernel(%arg0: memref<2xf32, #tpu.memory_space<smem>>, %arg1: memref<1xf32, #tpu.memory_space<smem>>) attributes {dimension_semantics = [], scalar_prefetch = 0 : i64, scratch_operands = 0 : i64, tpu.core_type = #tpu.core_type<tc>} {
    %c0 = arith.constant 0 : index
    %0 = memref.load %arg0[%c0] : memref<2xf32, #tpu.memory_space<smem>>
    %c1 = arith.constant 1 : index
    %1 = memref.load %arg0[%c1] : memref<2xf32, #tpu.memory_space<smem>>
    %2 = arith.addf %0, %1 : f32
    %c0_0 = arith.constant 0 : index
    %3 = memref.load %arg1[%c0_0] : memref<1xf32, #tpu.memory_space<smem>>
    memref.store %2, %arg1[%c0_0] : memref<1xf32, #tpu.memory_space<smem>>
    return
  }
}

</mosaic_0001>

<llo_original>
// kernel: tpu_custom_call.1
$region0: #{tpu_custom_call.1}
  #allocation0 [shape = 'u32[]', space=smem, size = 0x4, offset = 0x4, fixed_abs, tag = 'smem constant byte address 0x4 - core index']
  #allocation1 [shape = 'u32[144,128]{1,0:T(1,128)}', space=vmem, size = 0x12000, scoped, tag = 'internal scratch']
  %s0 = inlined_call_operand.hbm [shape: f32[2], index: 0, kind: input, shape index: {}]
  %s1 = inlined_call_operand.hbm [shape: f32[1], index: 1, kind: output, shape index: {}]
  %s2 = sld [smem:[#allocation0]]
  $region18: #{tpu_custom_call.1} parent=0
    _
  %s4 = ssub.s32 1, %s2
  %s5 = scalar_select 0, %s4, %s2
  $region1: #{tpu_custom_call.1} parent=0
    #allocation2 [shape = 'u8[512]{0}', space=smem, size = 0x200, scoped, tag = 'input window, operand 0, single buffered']
    #allocation3 [shape = 's32[1]{0}', space=sflag, size = 0x4, scoped, tag = 'scoped memory for tpu_custom_call.1']
    #allocation4 [shape = 's32[1]{0}', space=sflag, size = 0x4, scoped, tag = 'scoped memory for tpu_custom_call.1']
    #allocation5 [shape = 'u8[512]{0}', space=smem, size = 0x200, scoped, tag = 'output window, operand 0, single buffered']
    %6 = vsyncpa [#allocation3], 0
    %7 = vsyncpa [#allocation4], 0
    // Predicated region
    $region2: #{tpu_custom_call.1} parent=1 // pred_check
      _
    $region3: #{tpu_custom_call.1} parent=1 // pred_check_branch
      %9 = sbr.rel (0) target = $region5
    $region4: #{tpu_custom_call.1} parent=1 // pred_region
      %s11 = ssub.s32 16, 16
      %12 = vsyncadd [#allocation3], %s11
      %15 = dma.hbm_to_smem %s0, 16, [#allocation2], [#allocation3]
    $region5: #{tpu_custom_call.1} parent=1 // pred_fallthru
      _
    // Predicated region
    $region6: #{tpu_custom_call.1} parent=1 // pred_check
      _
    $region7: #{tpu_custom_call.1} parent=1 // pred_check_branch
      %17 = sbr.rel (0) target = $region9
    $region8: #{tpu_custom_call.1} parent=1 // pred_region
      %18 = dma.done [#allocation3], 16
    $region9: #{tpu_custom_call.1} parent=1 // pred_fallthru
      _
    %19 = sfence
    %s20 = sld [smem:[#allocation2]]
    %s21 = sld [smem:[#allocation2 + $0x1]]
    %s22 = sadd.f32 %s20, %s21
    %s23 = scalar_lea.smem [#allocation5], 0
    %24 = sst [smem:[%s23]] %s22
    // Predicated region
    $region10: #{tpu_custom_call.1} parent=1 // pred_check
      _
    $region11: #{tpu_custom_call.1} parent=1 // pred_check_branch
      %26 = sbr.rel (0) target = $region13
    $region12: #{tpu_custom_call.1} parent=1 // pred_region
      %s28 = ssub.s32 16, 16
      %29 = vsyncadd [#allocation4], %s28
      %32 = dma.smem_to_hbm [#allocation5], 16, %s1, [#allocation4]
    $region13: #{tpu_custom_call.1} parent=1 // pred_fallthru
      _
    // Predicated region
    $region14: #{tpu_custom_call.1} parent=1 // pred_check
      _
    $region15: #{tpu_custom_call.1} parent=1 // pred_check_branch
      %34 = sbr.rel (0) target = $region17
    $region16: #{tpu_custom_call.1} parent=1 // pred_region
      %35 = dma.done [#allocation4], 16
    $region17: #{tpu_custom_call.1} parent=1 // pred_fallthru
      _
    %36 = sfence
    %37 = vsyncpa [#allocation3], 1
    %38 = vsyncpa [#allocation4], 1

</llo_original>
